<compile_context>
chip_gen: v7x
topology: tpu7x:2x2x1
jax: 0.10.0
libtpu: 0.0.40
codegen_flags: <defaults>
</compile_context>

<pallas_src>
import functools
import math

import jax
import jax.numpy as jnp
from jax import lax
from jax.experimental import pallas as pl
from jax.experimental.pallas import tpu as pltpu

EPS = 1e-12
_NEG10_OVER_LN10 = -10.0 / math.log(10.0)   # -10 * log10(e)

# ~6 MiB of f32 per input tile; with default 2-deep pipelining that is
# 2 inputs x 2 buffers x 6 MiB = 24 MiB of VMEM, under the 40 MiB scoped
# limit below on all of v5e / v6e / v7x.
_TILE_BYTES_PER_INPUT = 6 << 20
_VMEM_LIMIT_BYTES = 40 << 20
_MAX_RB = 512


def _round_up(a, b):
    return (a + b - 1) // b * b


def _neg_sisdr_kernel(x_ref, t_ref, o_ref, xx_ref, tt_ref, xt_ref,
                      *, eps, t_len, t_tile, mask_tail):
    """Processes one (Rb, Tt) tile; accumulates 3 dot products across T tiles."""
    k = pl.program_id(1)

    @pl.when(k == 0)
    def _init():
        xx_ref[...] = jnp.zeros_like(xx_ref)
        tt_ref[...] = jnp.zeros_like(tt_ref)
        xt_ref[...] = jnp.zeros_like(xt_ref)

    x = x_ref[...].astype(jnp.float32)          # (Rb, Tt) estimate
    t = t_ref[...].astype(jnp.float32)          # (Rb, Tt) target

    if mask_tail:
        # The last T tile overhangs the array; its out-of-bounds lanes hold
        # stale VMEM data, so zero them before accumulating.  Pure VPU work,
        # fully hidden behind the HBM stream.
        col = lax.broadcasted_iota(jnp.int32, x.shape, 1) + k * t_tile
        valid = col < t_len
        x = jnp.where(valid, x, 0.0)
        t = jnp.where(valid, t, 0.0)

    xx_ref[...] += jnp.sum(x * x, axis=-1, keepdims=True)
    tt_ref[...] += jnp.sum(t * t, axis=-1, keepdims=True)
    xt_ref[...] += jnp.sum(x * t, axis=-1, keepdims=True)

    @pl.when(k == pl.num_programs(1) - 1)
    def _finalize():
        xx = xx_ref[...]                        # sum x^2        (Rb, 1)
        tt = tt_ref[...]                        # sum t^2        (Rb, 1)
        xt = xt_ref[...]                        # sum x*t        (Rb, 1)
        alpha = xt / (tt + eps)
        num = alpha * alpha * tt + eps          # sum((alpha*t)^2)     + eps
        den = num - 2.0 * alpha * xt + xx       # sum((alpha*t - x)^2) + eps
        # negative SI-SDR in dB
        o_ref[...] = _NEG10_OVER_LN10 * jnp.log(num / den)


def _neg_sisdr_rows(x, t, eps, tile_bytes=_TILE_BYTES_PER_INPUT):
    """Per-row negative SI-SDR for 2D (R, T) inputs via the Pallas kernel."""
    R, T = x.shape
    assert t.shape == (R, T)

    # --- block sizing (no padded copies; boundary blocks are masked) -------
    target_elems = max(tile_bytes // 4, 8 * 128)   # f32 elems per input tile
    T128 = _round_up(T, 128)
    # Give T as much of the budget as it can use (long, contiguous per-row
    # DMA runs), then spend the remainder on rows.
    Tt = min(T128, max(128, (target_elems // 8) // 128 * 128))
    Rb = max(8, min(_MAX_RB, (target_elems // Tt) // 8 * 8))
    if R >= 16:
        # Keep >= 2 row blocks so the "parallel" axis can feed both v7x cores.
        Rb = min(Rb, _round_up((R + 1) // 2, 8))
    Rb = min(Rb, _round_up(R, 8))

    grid = (pl.cdiv(R, Rb), pl.cdiv(T, Tt))
    mask_tail = (T % Tt) != 0

    kernel = functools.partial(_neg_sisdr_kernel, eps=eps,
                               t_len=T, t_tile=Tt, mask_tail=mask_tail)
    out = pl.pallas_call(
        kernel,
        out_shape=jax.ShapeDtypeStruct((R, 1), jnp.float32),
        grid=grid,
        in_specs=[
            pl.BlockSpec((Rb, Tt), lambda i, k: (i, k)),
            pl.BlockSpec((Rb, Tt), lambda i, k: (i, k)),
        ],
        out_specs=pl.BlockSpec((Rb, 1), lambda i, k: (i, 0)),
        scratch_shapes=[
            pltpu.VMEM((Rb, 1), jnp.float32),   # sum x^2
            pltpu.VMEM((Rb, 1), jnp.float32),   # sum t^2
            pltpu.VMEM((Rb, 1), jnp.float32),   # sum x*t
        ],
        compiler_params=pltpu.CompilerParams(
            dimension_semantics=("parallel", "arbitrary"),
            vmem_limit_bytes=_VMEM_LIMIT_BYTES,
        ),
    )(x, t)
    return out[:, 0]


def neg_sisdr(inp, target, *, reduction="mean", batch_mean=True, eps=EPS):
    """Pallas implementation of NegSISDR.forward for 2D/3D/4D inputs."""
    assert inp.shape == target.shape
    n_dims = inp.ndim
    assert n_dims in (2, 3, 4), (
        "Only 2D or 3D or 4D tensor is acceptable, but given "
        "{}D tensor.".format(n_dims))
    if reduction not in ("mean", "sum", None):
        raise ValueError("Invalid reduction type")

    lead = inp.shape[:-1]
    T = inp.shape[-1]
    R = math.prod(lead)

    # No dtype coercion here: bf16 inputs stream at half the HBM cost and are
    # upcast to f32 inside the kernel for accumulation.
    rows = _neg_sisdr_rows(inp.reshape(R, T), target.reshape(R, T), eps)
    loss = rows.reshape(lead)                   # negative SI-SDR per row

    if reduction:
        if n_dims == 3:
            loss = loss.mean(axis=1) if reduction == "mean" else loss.sum(axis=1)
        elif n_dims == 4:
            loss = (loss.mean(axis=(1, 2)) if reduction == "mean"
                    else loss.sum(axis=(1, 2)))
    if batch_mean:
        loss = loss.mean(axis=0)
    return loss


# ---------------------------------------------------------------------------
# Pure-JAX reference mirroring the PyTorch module (for validation).
# ---------------------------------------------------------------------------
def _sisdr_ref(inp, target, eps=EPS):
    alpha = jnp.sum(inp * target, axis=-1, keepdims=True) / (
        jnp.sum(target ** 2, axis=-1, keepdims=True) + eps)
    loss = (jnp.sum((alpha * target) ** 2, axis=-1) + eps) / (
        jnp.sum((alpha * target - inp) ** 2, axis=-1) + eps)
    return 10.0 * jnp.log10(loss)


def _reference_neg_sisdr(inp, target, reduction="mean", batch_mean=True, eps=EPS):
    n_dims = inp.ndim
    loss = -_sisdr_ref(inp, target, eps=eps)
    if reduction:
        if n_dims == 3:
            loss = loss.mean(axis=1) if reduction == "mean" else loss.sum(axis=1)
        elif n_dims == 4:
            loss = (loss.mean(axis=(1, 2)) if reduction == "mean"
                    else loss.sum(axis=(1, 2)))
    if batch_mean:
        loss = loss.mean(axis=0)
    return loss


if __name__ == "__main__":
    key = jax.random.PRNGKey(0)
    k1, k2, k3, k4, k5, k6 = jax.random.split(key, 6)

    # 3D case (batch, n_sources, T) -- the module's main convention.
    B, S, T = 2, 4, 256
    est = jax.random.normal(k1, (B, S, T), dtype=jnp.float32)
    tgt = jax.random.normal(k2, (B, S, T), dtype=jnp.float32)
    out = jax.block_until_ready(neg_sisdr(est, tgt))
    ref = _reference_neg_sisdr(est, tgt)
    assert jnp.allclose(out, ref, atol=1e-4, rtol=1e-5), (out, ref)

    # 2D case, T not a multiple of 128 (exercises in-kernel tail masking and
    # row-boundary blocks, no padded copies).
    B2, T2 = 5, 300
    est2 = jax.random.normal(k3, (B2, T2), dtype=jnp.float32)
    tgt2 = jax.random.normal(k4, (B2, T2), dtype=jnp.float32)
    out2 = jax.block_until_ready(neg_sisdr(est2, tgt2))
    ref2 = _reference_neg_sisdr(est2, tgt2)
    assert jnp.allclose(out2, ref2, atol=1e-4, rtol=1e-5), (out2, ref2)

    # 4D case (batch, n_sources, n_mics, T) with unaligned T and R.
    est3 = jax.random.normal(k5, (2, 3, 2, 300), dtype=jnp.float32)
    tgt3 = jax.random.normal(k6, (2, 3, 2, 300), dtype=jnp.float32)
    out3 = jax.block_until_ready(neg_sisdr(est3, tgt3))
    ref3 = _reference_neg_sisdr(est3, tgt3)
    assert jnp.allclose(out3, ref3, atol=1e-4, rtol=1e-5), (out3, ref3)

    # Force a tiny tile budget to exercise the multi-T-tile accumulation path
    # plus tail masking and multiple row blocks in one run.
    Rm, Tm = 24, 1000
    estm = jax.random.normal(k1, (Rm, Tm), dtype=jnp.float32)
    tgtm = jax.random.normal(k2, (Rm, Tm), dtype=jnp.float32)
    rows = jax.block_until_ready(
        _neg_sisdr_rows(estm, tgtm, EPS, tile_bytes=8 * 1024))
    rows_ref = -_sisdr_ref(estm, tgtm)
    assert jnp.allclose(rows, rows_ref, atol=1e-4, rtol=1e-5), (rows, rows_ref)

    print("KERNEL_OK")
</pallas_src>

<mosaic_0001>
module attributes {stable_mosaic.version = 11 : i64} {
  func.func @_neg_sisdr_kernel(%arg0: i32, %arg1: i32, %arg2: memref<8x256xf32, #tpu.memory_space<vmem>>, %arg3: memref<8x256xf32, #tpu.memory_space<vmem>>, %arg4: memref<8x1xf32, #tpu.memory_space<vmem>>, %arg5: memref<8x1xf32, #tpu.memory_space<vmem>>, %arg6: memref<8x1xf32, #tpu.memory_space<vmem>>, %arg7: memref<8x1xf32, #tpu.memory_space<vmem>>) attributes {dimension_semantics = [#tpu.dimension_semantics<parallel>, #tpu.dimension_semantics<arbitrary>], iteration_bounds = array<i64: 1, 1>, scalar_prefetch = 0 : i64, scratch_operands = 3 : i64, tpu.core_type = #tpu.core_type<tc>, window_params = [{transform_indices = @transform_0, window_bounds = array<i64: 8, 256>}, {transform_indices = @transform_1, window_bounds = array<i64: 8, 256>}, {transform_indices = @transform_2, window_bounds = array<i64: 8, 1>}]} {
    %c0_i32 = arith.constant 0 : i32
    %0 = arith.cmpi eq, %arg1, %c0_i32 : i32
    %1 = arith.extui %0 : i1 to i32
    %c0_i32_0 = arith.constant 0 : i32
    %2 = arith.cmpi ne, %1, %c0_i32_0 : i32
    scf.if %2 {
      %cst_20 = arith.constant 0.000000e+00 : f32
      %26 = vector.broadcast %cst_20 : f32 to vector<8x1xf32>
      %c0_21 = arith.constant 0 : index
      %c0_22 = arith.constant 0 : index
      %27 = vector.load %arg5[%c0_21, %c0_22] : memref<8x1xf32, #tpu.memory_space<vmem>>, vector<8x1xf32>
      tpu.vector_store %arg5[%c0_21, %c0_22], %26 {strides = array<i32>} : memref<8x1xf32, #tpu.memory_space<vmem>>, vector<8x1xf32>,
      %cst_23 = arith.constant 0.000000e+00 : f32
      %28 = vector.broadcast %cst_23 : f32 to vector<8x1xf32>
      %c0_24 = arith.constant 0 : index
      %c0_25 = arith.constant 0 : index
      %29 = vector.load %arg6[%c0_24, %c0_25] : memref<8x1xf32, #tpu.memory_space<vmem>>, vector<8x1xf32>
      tpu.vector_store %arg6[%c0_24, %c0_25], %28 {strides = array<i32>} : memref<8x1xf32, #tpu.memory_space<vmem>>, vector<8x1xf32>,
      %cst_26 = arith.constant 0.000000e+00 : f32
      %30 = vector.broadcast %cst_26 : f32 to vector<8x1xf32>
      %c0_27 = arith.constant 0 : index
      %c0_28 = arith.constant 0 : index
      %31 = vector.load %arg7[%c0_27, %c0_28] : memref<8x1xf32, #tpu.memory_space<vmem>>, vector<8x1xf32>
      tpu.vector_store %arg7[%c0_27, %c0_28], %30 {strides = array<i32>} : memref<8x1xf32, #tpu.memory_space<vmem>>, vector<8x1xf32>,
    } else {
    }
    %c0 = arith.constant 0 : index
    %c0_1 = arith.constant 0 : index
    %3 = vector.load %arg2[%c0, %c0_1] : memref<8x256xf32, #tpu.memory_space<vmem>>, vector<8x256xf32>
    %c0_2 = arith.constant 0 : index
    %c0_3 = arith.constant 0 : index
    %4 = vector.load %arg3[%c0_2, %c0_3] : memref<8x256xf32, #tpu.memory_space<vmem>>, vector<8x256xf32>
    %c0_4 = arith.constant 0 : index
    %c0_5 = arith.constant 0 : index
    %5 = vector.load %arg5[%c0_4, %c0_5] : memref<8x1xf32, #tpu.memory_space<vmem>>, vector<8x1xf32>
    %6 = arith.mulf %3, %3 : vector<8x256xf32>
    %cst = arith.constant dense<0.000000e+00> : vector<8xf32>
    %7 = vector.multi_reduction <add>, %6, %cst [1] : vector<8x256xf32> to vector<8xf32>
    %8 = vector.shape_cast %7 : vector<8xf32> to vector<8x1xf32>
    %9 = arith.addf %5, %8 : vector<8x1xf32>
    %c0_6 = arith.constant 0 : index
    %c0_7 = arith.constant 0 : index
    %10 = vector.load %arg5[%c0_6, %c0_7] : memref<8x1xf32, #tpu.memory_space<vmem>>, vector<8x1xf32>
    tpu.vector_store %arg5[%c0_6, %c0_7], %9 {strides = array<i32>} : memref<8x1xf32, #tpu.memory_space<vmem>>, vector<8x1xf32>,
    %c0_8 = arith.constant 0 : index
    %c0_9 = arith.constant 0 : index
    %11 = vector.load %arg6[%c0_8, %c0_9] : memref<8x1xf32, #tpu.memory_space<vmem>>, vector<8x1xf32>
    %12 = arith.mulf %4, %4 : vector<8x256xf32>
    %cst_10 = arith.constant dense<0.000000e+00> : vector<8xf32>
    %13 = vector.multi_reduction <add>, %12, %cst_10 [1] : vector<8x256xf32> to vector<8xf32>
    %14 = vector.shape_cast %13 : vector<8xf32> to vector<8x1xf32>
    %15 = arith.addf %11, %14 : vector<8x1xf32>
    %c0_11 = arith.constant 0 : index
    %c0_12 = arith.constant 0 : index
    %16 = vector.load %arg6[%c0_11, %c0_12] : memref<8x1xf32, #tpu.memory_space<vmem>>, vector<8x1xf32>
    tpu.vector_store %arg6[%c0_11, %c0_12], %15 {strides = array<i32>} : memref<8x1xf32, #tpu.memory_space<vmem>>, vector<8x1xf32>,
    %c0_13 = arith.constant 0 : index
    %c0_14 = arith.constant 0 : index
    %17 = vector.load %arg7[%c0_13, %c0_14] : memref<8x1xf32, #tpu.memory_space<vmem>>, vector<8x1xf32>
    %18 = arith.mulf %3, %4 : vector<8x256xf32>
    %cst_15 = arith.constant dense<0.000000e+00> : vector<8xf32>
    %19 = vector.multi_reduction <add>, %18, %cst_15 [1] : vector<8x256xf32> to vector<8xf32>
    %20 = vector.shape_cast %19 : vector<8xf32> to vector<8x1xf32>
    %21 = arith.addf %17, %20 : vector<8x1xf32>
    %c0_16 = arith.constant 0 : index
    %c0_17 = arith.constant 0 : index
    %22 = vector.load %arg7[%c0_16, %c0_17] : memref<8x1xf32, #tpu.memory_space<vmem>>, vector<8x1xf32>
    tpu.vector_store %arg7[%c0_16, %c0_17], %21 {strides = array<i32>} : memref<8x1xf32, #tpu.memory_space<vmem>>, vector<8x1xf32>,
    %c0_i32_18 = arith.constant 0 : i32
    %23 = arith.cmpi eq, %arg1, %c0_i32_18 : i32
    %24 = arith.extui %23 : i1 to i32
    %c0_i32_19 = arith.constant 0 : i32
    %25 = arith.cmpi ne, %24, %c0_i32_19 : i32
    scf.if %25 {
      %c0_20 = arith.constant 0 : index
      %c0_21 = arith.constant 0 : index
      %26 = vector.load %arg5[%c0_20, %c0_21] : memref<8x1xf32, #tpu.memory_space<vmem>>, vector<8x1xf32>
      %c0_22 = arith.constant 0 : index
      %c0_23 = arith.constant 0 : index
      %27 = vector.load %arg6[%c0_22, %c0_23] : memref<8x1xf32, #tpu.memory_space<vmem>>, vector<8x1xf32>
      %c0_24 = arith.constant 0 : index
      %c0_25 = arith.constant 0 : index
      %28 = vector.load %arg7[%c0_24, %c0_25] : memref<8x1xf32, #tpu.memory_space<vmem>>, vector<8x1xf32>
      %cst_26 = arith.constant 9.99999996E-13 : f32
      %29 = vector.broadcast %cst_26 : f32 to vector<8x1xf32>
      %30 = arith.addf %27, %29 : vector<8x1xf32>
      %31 = arith.divf %28, %30 : vector<8x1xf32>
      %32 = arith.mulf %31, %31 : vector<8x1xf32>
      %33 = arith.mulf %32, %27 : vector<8x1xf32>
      %cst_27 = arith.constant 9.99999996E-13 : f32
      %34 = vector.broadcast %cst_27 : f32 to vector<8x1xf32>
      %35 = arith.addf %33, %34 : vector<8x1xf32>
      %cst_28 = arith.constant 2.000000e+00 : f32
      %36 = vector.broadcast %cst_28 : f32 to vector<8x1xf32>
      %37 = arith.mulf %36, %31 : vector<8x1xf32>
      %38 = arith.mulf %37, %28 : vector<8x1xf32>
      %39 = arith.subf %35, %38 : vector<8x1xf32>
      %40 = arith.addf %39, %26 : vector<8x1xf32>
      %41 = arith.divf %35, %40 : vector<8x1xf32>
      %42 = math.log %41 : vector<8x1xf32>
      %cst_29 = arith.constant -4.34294462 : f32
      %43 = vector.broadcast %cst_29 : f32 to vector<8x1xf32>
      %44 = arith.mulf %43, %42 : vector<8x1xf32>
      %c0_30 = arith.constant 0 : index
      %c0_31 = arith.constant 0 : index
      %45 = vector.load %arg4[%c0_30, %c0_31] : memref<8x1xf32, #tpu.memory_space<vmem>>, vector<8x1xf32>
      tpu.vector_store %arg4[%c0_30, %c0_31], %44 {strides = array<i32>} : memref<8x1xf32, #tpu.memory_space<vmem>>, vector<8x1xf32>,
    } else {
    }
    return
  }
  func.func @transform_0(%arg0: i32, %arg1: i32) -> (i32, i32) {
    %c0_i32 = arith.constant 0 : i32
    return %arg0, %arg1 : i32, i32
  }
  func.func @transform_1(%arg0: i32, %arg1: i32) -> (i32, i32) {
    %c0_i32 = arith.constant 0 : i32
    return %arg0, %arg1 : i32, i32
  }
  func.func @transform_2(%arg0: i32, %arg1: i32) -> (i32, i32) {
    %c0_i32 = arith.constant 0 : i32
    %c0_i32_0 = arith.constant 0 : i32
    return %arg0, %c0_i32 : i32, i32
  }
}

</mosaic_0001>

<llo_original>
// kernel: tpu_custom_call.1
$region0: #{tpu_custom_call.1}
  #allocation0 [shape = 'u32[]', space=smem, size = 0x4, offset = 0x4, fixed_abs, tag = 'smem constant byte address 0x4 - core index']
  #allocation1 [shape = 'u32[144,128]{1,0:T(1,128)}', space=vmem, size = 0x12000, scoped, tag = 'internal scratch']
  #allocation2 [shape = 'f32[8,1]{1,0:T(8,128)}', space=vmem, size = 0x1000, scoped, tag = 'scratch operand']
  #allocation3 [shape = 'f32[8,1]{1,0:T(8,128)}', space=vmem, size = 0x1000, scoped, tag = 'scratch operand']
  #allocation4 [shape = 'f32[8,1]{1,0:T(8,128)}', space=vmem, size = 0x1000, scoped, tag = 'scratch operand']
  %s0 = inlined_call_operand.hbm [shape: f32[8,256], index: 0, kind: input, shape index: {}]
  %s1 = inlined_call_operand.hbm [shape: f32[8,256], index: 1, kind: input, shape index: {}]
  %s2 = inlined_call_operand.vmem [shape: f32[8,1], index: 2, kind: output, shape index: {}]
  %s3 = sld [smem:[#allocation0]]
  $region34: #{tpu_custom_call.1} parent=0
    _
  %s5 = ssub.s32 1, %s3
  %s6 = scalar_select 0, %s5, %s3
  $region1: #{tpu_custom_call.1} parent=0
    #allocation5 [shape = 'u8[8192]{0}', space=vmem, size = 0x2000, scoped, tag = 'input window, operand 0, single buffered']
    #allocation6 [shape = 's32[1]{0}', space=sflag, size = 0x4, scoped, tag = 'scoped memory for tpu_custom_call.1']
    #allocation7 [shape = 'u8[8192]{0}', space=vmem, size = 0x2000, scoped, tag = 'input window, operand 1, single buffered']
    #allocation8 [shape = 's32[1]{0}', space=sflag, size = 0x4, scoped, tag = 'scoped memory for tpu_custom_call.1']
    %7 = vsyncpa [#allocation6], 0
    %8 = vsyncpa [#allocation8], 0
    // Predicated region
    $region2: #{tpu_custom_call.1} parent=1 // pred_check
      _
    $region3: #{tpu_custom_call.1} parent=1 // pred_check_branch
      %10 = sbr.rel (0) target = $region5
    $region4: #{tpu_custom_call.1} parent=1 // pred_region
      %s12 = ssub.s32 256, 256
      %13 = vsyncadd [#allocation6], %s12
      %s15 = sshll.u32 [#allocation5], 4
      %s16 = int_to_ptr.vmem [resolvable:$true] %s15
      %18 = dma.hbm_to_vmem [thread:$0]  %s0, 256, %s16, [#allocation6]
    $region5: #{tpu_custom_call.1} parent=1 // pred_fallthru
      _
    // Predicated region
    $region6: #{tpu_custom_call.1} parent=1 // pred_check
      _
    $region7: #{tpu_custom_call.1} parent=1 // pred_check_branch
      %20 = sbr.rel (0) target = $region9
    $region8: #{tpu_custom_call.1} parent=1 // pred_region
      %s22 = ssub.s32 256, 256
      %23 = vsyncadd [#allocation8], %s22
      %s25 = sshll.u32 [#allocation7], 4
      %s26 = int_to_ptr.vmem [resolvable:$true] %s25
      %28 = dma.hbm_to_vmem [thread:$0]  %s1, 256, %s26, [#allocation8]
    $region9: #{tpu_custom_call.1} parent=1 // pred_fallthru
      _
    // Predicated region
    $region10: #{tpu_custom_call.1} parent=1 // pred_check
      _
    $region11: #{tpu_custom_call.1} parent=1 // pred_check_branch
      %30 = sbr.rel (0) target = $region13
    $region12: #{tpu_custom_call.1} parent=1 // pred_region
      %31 = dma.done [#allocation6], 256
    $region13: #{tpu_custom_call.1} parent=1 // pred_fallthru
      _
    // Predicated region
    $region14: #{tpu_custom_call.1} parent=1 // pred_check
      _
    $region15: #{tpu_custom_call.1} parent=1 // pred_check_branch
      %33 = sbr.rel (0) target = $region17
    $region16: #{tpu_custom_call.1} parent=1 // pred_region
      %34 = dma.done [#allocation8], 256
    $region17: #{tpu_custom_call.1} parent=1 // pred_fallthru
      _
    %p35 = scmp.eq.s32.totalorder 0, 0
    // Predicated region
    $region18: #{tpu_custom_call.1} parent=1 // pred_check
      %p36 = pneg %p35
    $region19: #{tpu_custom_call.1} parent=1 // pred_check_branch
      %38 = sbr.rel (%p36) target = $region21
    $region20: #{tpu_custom_call.1} parent=1 // pred_region
      %vm39 = vcmask 7168
      %40 = vst.msk [vmem:[#allocation2] sm:$0xff] %vm39, 0.0
      %41 = vst.msk [vmem:[#allocation3] sm:$0xff] %vm39, 0.0
      %42 = vst.msk [vmem:[#allocation4] sm:$0xff] %vm39, 0.0
    $region21: #{tpu_custom_call.1} parent=1 // pred_fallthru
      _
    %v43 = vld [vmem:[#allocation5] sm:$0xff]
    %v44 = vld [vmem:[#allocation5 + $0x8] sm:$0xff]
    %v45 = vld [vmem:[#allocation7] sm:$0xff]
    %v46 = vld [vmem:[#allocation7 + $0x8] sm:$0xff]
    %v47 = vld [vmem:[#allocation2] sm:$0xff]
    %v48 = vmul.f32 %v43, %v43
    %v49 = vmul.f32 %v44, %v44
    %v50 = vadd.f32 %v48, %v49
    %51 = vadd.xlane.f32.xlu0 %v50
    %v52 = vpop.xlane.xlu0 %51
    %v53 = vadd.f32 %v47, %v52
    %vm54 = vcmask 7168
    %55 = vst.msk [vmem:[#allocation2] sm:$0xff] %vm54, %v53
    %v56 = vld [vmem:[#allocation3] sm:$0xff]
    %v57 = vmul.f32 %v45, %v45
    %v58 = vmul.f32 %v46, %v46
    %v59 = vadd.f32 %v57, %v58
    %60 = vadd.xlane.f32.xlu0 %v59
    %v61 = vpop.xlane.xlu0 %60
    %v62 = vadd.f32 %v56, %v61
    %63 = vst.msk [vmem:[#allocation3] sm:$0xff] %vm54, %v62
    %v64 = vld [vmem:[#allocation4] sm:$0xff]
    %v65 = vmul.f32 %v43, %v45
    %v66 = vmul.f32 %v44, %v46
    %v67 = vadd.f32 %v65, %v66
    %68 = vadd.xlane.f32.xlu0 %v67
    %v69 = vpop.xlane.xlu0 %68
    %v70 = vadd.f32 %v64, %v69
    %71 = vst.msk [vmem:[#allocation4] sm:$0xff] %vm54, %v70
    // Predicated region
    $region22: #{tpu_custom_call.1} parent=1 // pred_check
      %p72 = pneg %p35
    $region23: #{tpu_custom_call.1} parent=1 // pred_check_branch
      %74 = sbr.rel (%p72) target = $region25
    $region24: #{tpu_custom_call.1} parent=1 // pred_region
      %v75 = vld [vmem:[#allocation2] sm:$0xff]
      %v76 = vld [vmem:[#allocation3] sm:$0xff]
      %v77 = vld [vmem:[#allocation4] sm:$0xff]
      %v78 = vadd.f32 %v76, 1e-12
      %v79 = vrcp.pop %v78
      %v80 = vmul.f32 %v77, %v79
      %v81 = vmul.f32 %v80, %v80
      %v82 = vmul.f32 %v81, %v76
      %v83 = vadd.f32 %v82, 1e-12
      %v84 = vmul.f32 %v80, 2.0
      %v85 = vmul.f32 %v84, %v77
      %v86 = vsub.f32 %v83, %v85
      %v87 = vadd.f32 %v86, %v75
      %v88 = vrcp.pop %v87
      %v89 = vmul.f32 %v83, %v88
      %v90 = vlog2.pop %v89
      %v91 = vmul.f32 %v90, 0.6931472
      %v92 = vmul.f32 %v91, -4.3429446
      %93 = vst.msk [vmem:[%s2] sm:$0xff] %vm54, %v92
    $region25: #{tpu_custom_call.1} parent=1 // pred_fallthru
      _
    // Predicated region
    $region26: #{tpu_custom_call.1} parent=1 // pred_check
      _
    $region27: #{tpu_custom_call.1} parent=1 // pred_check_branch
      %95 = sbr.rel (0) target = $region29
    $region28: #{tpu_custom_call.1} parent=1 // pred_region
      _
    $region29: #{tpu_custom_call.1} parent=1 // pred_fallthru
      _
    // Predicated region
    $region30: #{tpu_custom_call.1} parent=1 // pred_check
      _
    $region31: #{tpu_custom_call.1} parent=1 // pred_check_branch
      %97 = sbr.rel (0) target = $region33
    $region32: #{tpu_custom_call.1} parent=1 // pred_region
      _
    $region33: #{tpu_custom_call.1} parent=1 // pred_fallthru
      _
    %98 = vsyncpa [#allocation6], 1
    %99 = vsyncpa [#allocation8], 1

</llo_original>
